<compile_context>
chip_gen: v6e
topology: v6e:2x2x1
jax: 0.10.0
libtpu: 0.0.40
codegen_flags: <defaults>
</compile_context>

<pallas_src>
import functools

import jax
import jax.numpy as jnp
from jax import lax
from jax.experimental import pallas as pl
from jax.experimental.pallas import tpu as pltpu


def _channel_op_kernel(*refs, c_out, hw_total, use_fold):
    if use_fold:
        x_ref, w_ref, scat_ref, o_ref = refs
    else:
        x_ref, w_ref, o_ref = refs

    x = x_ref[...]                                        # (TS, Ck, HWk), native dtype

    # ---- AdaptiveAvgPool2d((1,1)): mean over the spatial (lane) axis ----
    # f32 accumulation without keeping a fp32 copy of the block live.
    pooled = jnp.sum(x, axis=-1, dtype=jnp.float32) * (1.0 / hw_total)   # (TS, Ck)

    if use_fold:
        scat = scat_ref[...]                              # (C, Ck) f32, scat[c, c*k+j] = 1
        # Gather the k spatial folds of each channel: (TS, Ck) x (C, Ck)^T -> (TS, C).
        pooled = lax.dot_general(pooled, scat, (((1,), (1,)), ((), ())),
                                 preferred_element_type=jnp.float32)

    w = w_ref[...]                                        # (C_in, C_out) f32

    # ---- 1x1 conv, no bias: y[n, o] = sum_i pooled[n, i] * w[i, o] ----
    if c_out >= 16:
        # Realistic channel counts: a handful of MXU pushes, hidden under the HBM stream.
        y = jnp.dot(pooled, w, preferred_element_type=jnp.float32)       # (TS, C)
    else:
        # Tiny C: VPU multiply + sublane reduce beats an almost-empty MXU pass.
        y = jnp.sum(pooled[:, :, None] * w[None, :, :], axis=1)          # (TS, C)

    s = jax.nn.sigmoid(y)                                 # (TS, C) f32

    if use_fold:
        # Scatter the per-channel gate back to the folded rows: (TS, C) @ (C, Ck).
        s = jnp.dot(s, scat, preferred_element_type=jnp.float32)         # (TS, Ck)

    # ---- Gate broadcast across the spatial (lane) axis, in the input dtype ----
    o_ref[...] = x * s[:, :, None].astype(o_ref.dtype)


def channel_operation(x_nchw, weight):
    """ChannelOperation forward: x * sigmoid(Conv1x1(AdaptiveAvgPool2d(x))).

    x_nchw: (N, C, H, W) as in PyTorch.  weight: (C, C, 1, 1) from Conv2d(dim, dim, 1, bias=False).
    """
    N, C, H, W = x_nchw.shape
    HW = H * W
    dtype = x_nchw.dtype
    itemsize = jnp.dtype(dtype).itemsize

    # --- Layout: fold spatial onto sublanes when C does not fill a sublane pack ---
    pack = max(8, 32 // itemsize)          # 8 rows f32, 16 bf16, 32 int8 per packed tile
    k = 1
    if C % pack != 0:
        for cand in range(2, pack + 1):
            if HW % cand == 0 and (C * cand) % pack == 0:
                k = cand
                break
    # TODO(synk): when HW is not a multiple of 128, also fold channels into the lane
    # axis for unmasked lane-dense stores; the sublane fold above only fixes small-C packing.
    Ck, HWk = C * k, HW // k
    x2 = x_nchw.reshape(N, Ck, HWk)                        # free reshape (row-major NCHW)

    w_t = weight.reshape(C, C).T.astype(jnp.float32)       # (C_in, C_out)

    # --- Batch blocking: ~2 MiB blocks, >= 4 pipelined grid steps when N allows ---
    per_sample_bytes = C * HW * itemsize
    ts = max(1, min(N, (2 * 1024 * 1024) // max(1, per_sample_bytes)))
    desired_steps = min(4, N)
    if desired_steps > 1:
        ts = min(ts, max(1, N // desired_steps))
    grid_n = pl.cdiv(N, ts)
    block_bytes = ts * per_sample_bytes
    # 2x(in) + 2x(out) pipeline buffers + f32 reduction temps + margin; <= 48 MiB (v7x-safe).
    vmem_limit = int(min(48 << 20, max(32 << 20, 8 * block_bytes + (4 << 20))))

    kernel = functools.partial(_channel_op_kernel, c_out=C, hw_total=HW, use_fold=(k > 1))

    in_specs = [
        pl.BlockSpec((ts, Ck, HWk), lambda n: (n, 0, 0)),  # x block: whole samples, lane-dense
        pl.BlockSpec((C, C), lambda n: (0, 0)),            # 1x1 conv weight (fetched once)
    ]
    args = [x2, w_t]
    if k > 1:
        # scat[c, c*k + j] = 1 : fold/scatter map between channels and folded rows.
        scat = jnp.repeat(jnp.eye(C, dtype=jnp.float32), k, axis=1)      # (C, Ck)
        in_specs.append(pl.BlockSpec((C, Ck), lambda n: (0, 0)))
        args.append(scat)

    out = pl.pallas_call(
        kernel,
        out_shape=jax.ShapeDtypeStruct((N, Ck, HWk), dtype),
        grid_spec=pltpu.PrefetchScalarGridSpec(
            num_scalar_prefetch=0,
            grid=(grid_n,),
            in_specs=in_specs,
            out_specs=pl.BlockSpec((ts, Ck, HWk), lambda n: (n, 0, 0)),
        ),
        compiler_params=pltpu.CompilerParams(
            dimension_semantics=("parallel",),
            vmem_limit_bytes=vmem_limit,
        ),
    )(*args)

    # TODO(synk): for N == 1 (grid collapses to 1 step) a two-pass variant
    # (tiny gate kernel + parallel elementwise multiply kernel) would restore
    # pipelining and both v7x TensorCores; not needed for the shapes tested here.
    return out.reshape(N, C, H, W)


def channel_operation_reference(x, weight):
    """Pure-JAX reference (same math, f32) for validation."""
    xf = x.astype(jnp.float32)
    pooled = jnp.mean(xf, axis=(2, 3))                                    # (N, C)
    w = weight.reshape(weight.shape[0], weight.shape[1]).astype(jnp.float32)  # (C_out, C_in)
    s = jax.nn.sigmoid(pooled @ w.T)                                      # (N, C)
    return xf * s[:, :, None, None]


if __name__ == "__main__":
    key = jax.random.PRNGKey(0)
    cases = [
        # (N, C, H, W, dtype, atol, rtol)
        (2, 4, 16, 16, jnp.float32, 1e-3, 1e-3),   # required small shape; sublane fold k=2, VPU conv
        (2, 4, 16, 16, jnp.bfloat16, 5e-2, 5e-2),  # bf16: f32 pooling accumulate, bf16 gate multiply
        (3, 48, 7, 7, jnp.float32, 1e-3, 1e-3),    # realistic C, HW=49 (not 128-multiple), MXU conv
        (9, 8, 4, 4, jnp.float32, 1e-3, 1e-3),     # partial last batch block (grid=5, 2 samples/block)
    ]
    for idx, (N, C, H, W, dt, atol, rtol) in enumerate(cases):
        kx, kw, key = jax.random.split(key, 3)
        x = jax.random.normal(kx, (N, C, H, W), jnp.float32).astype(dt)
        weight = (jax.random.normal(kw, (C, C, 1, 1), jnp.float32) * (1.0 / C)).astype(dt)

        out = jax.block_until_ready(channel_operation(x, weight))
        ref = jax.block_until_ready(channel_operation_reference(x, weight))

        assert out.shape == (N, C, H, W), f"case {idx}: bad shape {out.shape}"
        err = float(jnp.max(jnp.abs(out.astype(jnp.float32) - ref)))
        assert jnp.allclose(out.astype(jnp.float32), ref, atol=atol, rtol=rtol), (
            f"case {idx} (N={N}, C={C}, H={H}, W={W}, dtype={dt.__name__}): max abs err = {err}")

    print("KERNEL_OK")
</pallas_src>

<mosaic_0001>
module attributes {stable_mosaic.version = 11 : i64} {
  func.func @_channel_op_kernel(%arg0: i32, %arg1: memref<1x8x128xf32, #tpu.memory_space<vmem>>, %arg2: memref<4x4xf32, #tpu.memory_space<vmem>>, %arg3: memref<4x8xf32, #tpu.memory_space<vmem>>, %arg4: memref<1x8x128xf32, #tpu.memory_space<vmem>>) attributes {dimension_semantics = [#tpu.dimension_semantics<parallel>], iteration_bounds = array<i64: 2>, scalar_prefetch = 0 : i64, scratch_operands = 0 : i64, tpu.core_type = #tpu.core_type<tc>, window_params = [{transform_indices = @transform_0, window_bounds = array<i64: 1, 8, 128>}, {pipeline_mode = #tpu.pipeline_mode<synchronous>, transform_indices = @transform_1, window_bounds = array<i64: 4, 4>}, {pipeline_mode = #tpu.pipeline_mode<synchronous>, transform_indices = @transform_2, window_bounds = array<i64: 4, 8>}, {transform_indices = @transform_3, window_bounds = array<i64: 1, 8, 128>}]} {
    %c0 = arith.constant 0 : index
    %c0_0 = arith.constant 0 : index
    %c0_1 = arith.constant 0 : index
    %0 = vector.load %arg1[%c0, %c0_0, %c0_1] : memref<1x8x128xf32, #tpu.memory_space<vmem>>, vector<1x8x128xf32>
    %cst = arith.constant dense<0.000000e+00> : vector<1x8xf32>
    %1 = vector.multi_reduction <add>, %0, %cst [2] : vector<1x8x128xf32> to vector<1x8xf32>
    %cst_2 = arith.constant 3.906250e-03 : f32
    %2 = vector.broadcast %cst_2 : f32 to vector<1x8xf32>
    %3 = arith.mulf %1, %2 : vector<1x8xf32>
    %c0_3 = arith.constant 0 : index
    %c0_4 = arith.constant 0 : index
    %4 = vector.load %arg3[%c0_3, %c0_4] : memref<4x8xf32, #tpu.memory_space<vmem>>, vector<4x8xf32>
    %cst_5 = arith.constant dense<0.000000e+00> : vector<1x4xf32>
    %5 = tpu.matmul %3, %4, %cst_5 {dimension_numbers = #tpu.dot_dimension_numbers<[1], [1], [0], [0], [0, 0, 1, 0], [], []>} : vector<1x8xf32>, vector<4x8xf32>, vector<1x4xf32> -> vector<1x4xf32>
    %c0_6 = arith.constant 0 : index
    %c0_7 = arith.constant 0 : index
    %6 = vector.load %arg2[%c0_6, %c0_7] : memref<4x4xf32, #tpu.memory_space<vmem>>, vector<4x4xf32>
    %7 = vector.shape_cast %5 : vector<1x4xf32> to vector<1x4x1xf32>
    %8 = vector.shape_cast %6 : vector<4x4xf32> to vector<1x4x4xf32>
    %9 = vector.broadcast %7 : vector<1x4x1xf32> to vector<1x4x4xf32>
    %10 = arith.mulf %9, %8 : vector<1x4x4xf32>
    %cst_8 = arith.constant dense<0.000000e+00> : vector<1x4xf32>
    %11 = vector.multi_reduction <add>, %10, %cst_8 [1] : vector<1x4x4xf32> to vector<1x4xf32>
    %12 = arith.negf %11 : vector<1x4xf32>
    %13 = math.exp %12 : vector<1x4xf32>
    %cst_9 = arith.constant 1.000000e+00 : f32
    %14 = vector.broadcast %cst_9 : f32 to vector<1x4xf32>
    %15 = arith.addf %14, %13 : vector<1x4xf32>
    %16 = arith.divf %14, %15 : vector<1x4xf32>
    %cst_10 = arith.constant dense<0.000000e+00> : vector<1x8xf32>
    %17 = tpu.matmul %16, %4, %cst_10 {dimension_numbers = #tpu.dot_dimension_numbers<[1], [0], [0], [1], [0, 0, 1, 1], [], []>} : vector<1x4xf32>, vector<4x8xf32>, vector<1x8xf32> -> vector<1x8xf32>
    %18 = vector.shape_cast %17 : vector<1x8xf32> to vector<1x8x1xf32>
    %19 = vector.broadcast %18 : vector<1x8x1xf32> to vector<1x8x128xf32>
    %20 = arith.mulf %0, %19 : vector<1x8x128xf32>
    %c0_11 = arith.constant 0 : index
    %c0_12 = arith.constant 0 : index
    %c0_13 = arith.constant 0 : index
    %21 = vector.load %arg4[%c0_11, %c0_12, %c0_13] : memref<1x8x128xf32, #tpu.memory_space<vmem>>, vector<1x8x128xf32>
    tpu.vector_store %arg4[%c0_11, %c0_12, %c0_13], %20 {strides = array<i32>} : memref<1x8x128xf32, #tpu.memory_space<vmem>>, vector<1x8x128xf32>,
    return
  }
  func.func @transform_0(%arg0: i32) -> (i32, i32, i32) {
    %c0_i32 = arith.constant 0 : i32
    %c0_i32_0 = arith.constant 0 : i32
    %c0_i32_1 = arith.constant 0 : i32
    return %arg0, %c0_i32, %c0_i32_0 : i32, i32, i32
  }
  func.func @transform_1(%arg0: i32) -> (i32, i32) {
    %c0_i32 = arith.constant 0 : i32
    %c0_i32_0 = arith.constant 0 : i32
    %c0_i32_1 = arith.constant 0 : i32
    return %c0_i32, %c0_i32_0 : i32, i32
  }
  func.func @transform_2(%arg0: i32) -> (i32, i32) {
    %c0_i32 = arith.constant 0 : i32
    %c0_i32_0 = arith.constant 0 : i32
    %c0_i32_1 = arith.constant 0 : i32
    return %c0_i32, %c0_i32_0 : i32, i32
  }
  func.func @transform_3(%arg0: i32) -> (i32, i32, i32) {
    %c0_i32 = arith.constant 0 : i32
    %c0_i32_0 = arith.constant 0 : i32
    %c0_i32_1 = arith.constant 0 : i32
    return %arg0, %c0_i32, %c0_i32_0 : i32, i32, i32
  }
}

</mosaic_0001>

<llo_original>
// kernel: tpu_custom_call.1
$region0: #{tpu_custom_call.1}
  #allocation0 [shape = 'u32[]', space=smem, size = 0x4, offset = 0x4, fixed_abs, tag = 'smem constant byte address 0x4 - core index']
  #allocation1 [shape = 'u32[144,128]{1,0:T(1,128)}', space=vmem, size = 0x12000, scoped, tag = 'internal scratch']
  %s0 = inlined_call_operand.hbm [shape: f32[2,8,128], index: 0, kind: input, shape index: {}]
  %s1 = inlined_call_operand.hbm [shape: f32[4,4], index: 1, kind: input, shape index: {}]
  %s2 = inlined_call_operand.hbm [shape: f32[4,8], index: 2, kind: input, shape index: {}]
  %s3 = inlined_call_operand.hbm [shape: f32[2,8,128], index: 3, kind: output, shape index: {}]
  %s4 = sld [smem:[#allocation0]]
  $region57: #{tpu_custom_call.1} parent=0
    _
  %s6 = ssub.s32 1, %s4
  %s7 = scalar_select 0, %s6, %s4
  $region1: #{tpu_custom_call.1} parent=0
    #allocation2 [shape = 'u8[8192]{0}', space=vmem, size = 0x2000, scoped, tag = 'input window, operand 0']
    #allocation3 [shape = 's32[2]{0}', space=sflag, size = 0x8, scoped, tag = 'scoped memory for tpu_custom_call.1']
    #allocation4 [shape = 's32[2]{0}', space=sflag, size = 0x8, scoped, tag = 'scoped memory for tpu_custom_call.1']
    #allocation5 [shape = 'u8[2048]{0}', space=vmem, size = 0x800, scoped, tag = 'input window, operand 1, single buffered']
    #allocation6 [shape = 's32[1]{0}', space=sflag, size = 0x4, scoped, tag = 'scoped memory for tpu_custom_call.1']
    #allocation7 [shape = 'u8[2048]{0}', space=vmem, size = 0x800, scoped, tag = 'input window, operand 2, single buffered']
    #allocation8 [shape = 'u8[8192]{0}', space=vmem, size = 0x2000, scoped, tag = 'output window, operand 0']
    %8 = vsyncpa [#allocation3], 0
    %s9 = scalar_lea.sflag [#allocation3], 1
    %10 = vsyncpa %s9, 0
    %11 = vsyncpa [#allocation6], 0
    %12 = vsyncpa [#allocation4], 0
    %s13 = scalar_lea.sflag [#allocation4], 1
    %14 = vsyncpa %s13, 0
    loop: start=0, step=1, limit=4
    $region2: #{tpu_custom_call.1} parent=1 // loop_pre_header
      _
    $region3: #{tpu_custom_call.1} parent=1 // loop_header
      %s16 = sphi 0, %s20
      %p17 = scmp.ge.s32.totalorder %s16, 4
      %s26 = sphi 0, %s28
      %s29 = sphi 0, %s26
      %s30 = sphi 0, %s29
      %s46 = sphi 0, %s30
      %s50 = sphi 0, %s50
      %s52 = sphi 0, %s50
      %s53 = sphi 0, %s52
      %s67 = sphi 0, %s53
      %s71 = sphi 0, %s71
      %s73 = sphi 0, %s71
      %s74 = sphi 0, %s73
      %s88 = sphi 0, %s74
      %s94 = sphi 0, %s96
      %s97 = sphi 0, %s94
      %s98 = sphi 0, %s97
      %s114 = sphi 0, %s98
    $region4: #{tpu_custom_call.1} parent=1 // loop_header_branch
      %19 = sbr.rel (%p17) target = $region8
    $region5: #{tpu_custom_call.1} parent=1 // loop_body
      %s21 = ssub.s32 %s16, 1
      %s22 = ssub.s32 %s16, 2
      %s23 = sadd.s32 %s16, 1
      %s24 = ssub.s32 %s16, %s23
      %p25 = scmp.eq.s32.totalorder %s24, 0
      %s27 = sadd.s32 %s26, 1
      %s28 = scalar_select %p25, %s26, %s27
      %p31 = pneg %p25
      %p32 = scmp.eq.s32.totalorder %s16, 1
      %p33 = por %p31, %p32
      %p34 = scmp.ne.s32.totalorder %s26, %s29
      %p35 = scmp.eq.s32.totalorder %s16, 0
      %p36 = por %p34, %p35
      %p37 = scmp.ne.s32.totalorder %s26, %s29
      %p38 = scmp.eq.s32.totalorder %s21, 1
      %p39 = por %p37, %p38
      %p40 = scmp.ne.s32.totalorder %s29, %s30
      %p41 = scmp.eq.s32.totalorder %s21, 0
      %p42 = por %p40, %p41
      %p43 = scmp.ne.s32.totalorder %s29, %s30
      %p44 = scmp.eq.s32.totalorder %s22, 1
      %p45 = por %p43, %p44
      %p47 = scmp.ne.s32.totalorder %s30, %s46
      %p48 = scmp.eq.s32.totalorder %s22, 0
      %p49 = por %p47, %p48
      %s51 = sadd.s32 %s50, 1
      %p54 = scmp.eq.s32.totalorder %s16, 1
      %p55 = scmp.ne.s32.totalorder %s50, %s52
      %p56 = scmp.eq.s32.totalorder %s16, 0
      %p57 = por %p55, %p56
      %p58 = scmp.ne.s32.totalorder %s50, %s52
      %p59 = scmp.eq.s32.totalorder %s21, 1
      %p60 = por %p58, %p59
      %p61 = scmp.ne.s32.totalorder %s52, %s53
      %p62 = scmp.eq.s32.totalorder %s21, 0
      %p63 = por %p61, %p62
      %p64 = scmp.ne.s32.totalorder %s52, %s53
      %p65 = scmp.eq.s32.totalorder %s22, 1
      %p66 = por %p64, %p65
      %p68 = scmp.ne.s32.totalorder %s53, %s67
      %p69 = scmp.eq.s32.totalorder %s22, 0
      %p70 = por %p68, %p69
      %s72 = sadd.s32 %s71, 1
      %p75 = scmp.eq.s32.totalorder %s16, 1
      %p76 = scmp.ne.s32.totalorder %s71, %s73
      %p77 = scmp.eq.s32.totalorder %s16, 0
      %p78 = por %p76, %p77
      %p79 = scmp.ne.s32.totalorder %s71, %s73
      %p80 = scmp.eq.s32.totalorder %s21, 1
      %p81 = por %p79, %p80
      %p82 = scmp.ne.s32.totalorder %s73, %s74
      %p83 = scmp.eq.s32.totalorder %s21, 0
      %p84 = por %p82, %p83
      %p85 = scmp.ne.s32.totalorder %s73, %s74
      %p86 = scmp.eq.s32.totalorder %s22, 1
      %p87 = por %p85, %p86
      %p89 = scmp.ne.s32.totalorder %s74, %s88
      %p90 = scmp.eq.s32.totalorder %s22, 0
      %p91 = por %p89, %p90
      %s92 = ssub.s32 %s16, %s23
      %p93 = scmp.eq.s32.totalorder %s92, 0
      %s95 = sadd.s32 %s94, 1
      %s96 = scalar_select %p93, %s94, %s95
      %p99 = pneg %p93
      %p100 = scmp.eq.s32.totalorder %s16, 1
      %p101 = por %p99, %p100
      %p102 = scmp.ne.s32.totalorder %s94, %s97
      %p103 = scmp.eq.s32.totalorder %s16, 0
      %p104 = por %p102, %p103
      %p105 = scmp.ne.s32.totalorder %s94, %s97
      %p106 = scmp.eq.s32.totalorder %s21, 1
      %p107 = por %p105, %p106
      %p108 = scmp.ne.s32.totalorder %s97, %s98
      %p109 = scmp.eq.s32.totalorder %s21, 0
      %p110 = por %p108, %p109
      %p111 = scmp.ne.s32.totalorder %s97, %s98
      %p112 = scmp.eq.s32.totalorder %s22, 1
      %p113 = por %p111, %p112
      %p115 = scmp.ne.s32.totalorder %s98, %s114
      %p116 = scmp.eq.s32.totalorder %s22, 0
      %p117 = por %p115, %p116
      %p118 = scmp.le.s32.totalorder 1, %s16
      %p119 = scmp.lt.s32.totalorder %s16, 3
      %p120 = pnand %p118, %p119
      %p121 = pneg %p120
      // Predicated region
      $region9: #{tpu_custom_call.1} parent=5 // pred_check
        _
      $region10: #{tpu_custom_call.1} parent=5 // pred_check_branch
        %123 = sbr.rel (%p120) target = $region12
      $region11: #{tpu_custom_call.1} parent=5 // pred_region
        %s124 = ssub.s32 %s16, 1
        // Predicated region
        $region13: #{tpu_custom_call.1} parent=11 // pred_check
          %p125 = pneg %p63
        $region14: #{tpu_custom_call.1} parent=11 // pred_check_branch
          %127 = sbr.rel (%p125) target = $region16
        $region15: #{tpu_custom_call.1} parent=11 // pred_region
          %s129 = ssub.s32 64, 64
          %130 = vsyncadd [#allocation6], %s129
          %s132 = sshll.u32 [#allocation5], 4
          %s133 = int_to_ptr.vmem [resolvable:$true] %s132
          %135 = dma.hbm_to_vmem [thread:$0]  %s1, 64, %s133, [#allocation6]
        $region16: #{tpu_custom_call.1} parent=11 // pred_fallthru
          _
        // Predicated region
        $region17: #{tpu_custom_call.1} parent=11 // pred_check
          %p136 = pneg %p84
        $region18: #{tpu_custom_call.1} parent=11 // pred_check_branch
          %138 = sbr.rel (%p136) target = $region20
        $region19: #{tpu_custom_call.1} parent=11 // pred_region
          %s140 = ssub.s32 64, 64
          %141 = vsyncadd [#allocation6], %s140
          %s143 = sshll.u32 [#allocation7], 4
          %s144 = int_to_ptr.vmem [resolvable:$true] %s143
          %146 = dma.hbm_to_vmem [thread:$0]  %s2, 64, %s144, [#allocation6]
        $region20: #{tpu_custom_call.1} parent=11 // pred_fallthru
          _
      $region12: #{tpu_custom_call.1} parent=5 // pred_fallthru
        _
      %p147 = scmp.lt.s32.totalorder %s16, 2
      // Predicated region
      $region21: #{tpu_custom_call.1} parent=5 // pred_check
        %p148 = pneg %p147
      $region22: #{tpu_custom_call.1} parent=5 // pred_check_branch
        %150 = sbr.rel (%p148) target = $region24
      $region23: #{tpu_custom_call.1} parent=5 // pred_region
        // Predicated region
        $region25: #{tpu_custom_call.1} parent=23 // pred_check
          %p151 = pneg %p36
        $region26: #{tpu_custom_call.1} parent=23 // pred_check_branch
          %153 = sbr.rel (%p151) target = $region28
        $region27: #{tpu_custom_call.1} parent=23 // pred_region
          %s154 = sand.u32 %s26, 1
          %s155 = scalar_lea.sflag [#allocation3], %s154
          %s156 = sand.u32 %s26, 1
          %s157 = smul.addr %s156, 8
          %s158 = scalar_lea.vmem [#allocation2], %s157
          %s160 = ssub.s32 128, 128
          %161 = vsyncadd %s155, %s160
          %s162 = smul.addr %s16, 128
          %s163 = scalar_lea.hbm %s0, %s162
          %s165 = sshll.u32 %s158, 4
          %s166 = int_to_ptr.vmem [resolvable:$true] %s165
          %168 = dma.hbm_to_vmem [thread:$0]  %s163, 128, %s166, %s155
        $region28: #{tpu_custom_call.1} parent=23 // pred_fallthru
          _
      $region24: #{tpu_custom_call.1} parent=5 // pred_fallthru
        _
      %p169 = scmp.le.s32.totalorder 1, %s16
      %p170 = scmp.lt.s32.totalorder %s16, 3
      %p171 = pnand %p169, %p170
      %p172 = pneg %p171
      // Predicated region
      $region29: #{tpu_custom_call.1} parent=5 // pred_check
        _
      $region30: #{tpu_custom_call.1} parent=5 // pred_check_branch
        %174 = sbr.rel (%p171) target = $region32
      $region31: #{tpu_custom_call.1} parent=5 // pred_region
        %s175 = ssub.s32 %s16, 1
        %s176 = sand.u32 %s29, 1
        %s177 = scalar_lea.sflag [#allocation3], %s176
        %s178 = sand.u32 %s29, 1
        %s179 = smul.addr %s178, 8
        %s180 = scalar_lea.vmem [#allocation2], %s179
        // Predicated region
        $region33: #{tpu_custom_call.1} parent=31 // pred_check
          %p181 = pneg %p42
        $region34: #{tpu_custom_call.1} parent=31 // pred_check_branch
          %183 = sbr.rel (%p181) target = $region36
        $region35: #{tpu_custom_call.1} parent=31 // pred_region
          %184 = dma.done %s177, 128
        $region36: #{tpu_custom_call.1} parent=31 // pred_fallthru
          _
        // Predicated region
        $region37: #{tpu_custom_call.1} parent=31 // pred_check
          %p185 = pneg %p63
        $region38: #{tpu_custom_call.1} parent=31 // pred_check_branch
          %187 = sbr.rel (%p185) target = $region40
        $region39: #{tpu_custom_call.1} parent=31 // pred_region
          %188 = dma.done [#allocation6], 64
        $region40: #{tpu_custom_call.1} parent=31 // pred_fallthru
          _
        // Predicated region
        $region41: #{tpu_custom_call.1} parent=31 // pred_check
          %p189 = pneg %p84
        $region42: #{tpu_custom_call.1} parent=31 // pred_check_branch
          %191 = sbr.rel (%p189) target = $region44
        $region43: #{tpu_custom_call.1} parent=31 // pred_region
          %192 = dma.done [#allocation6], 64
        $region44: #{tpu_custom_call.1} parent=31 // pred_fallthru
          _
        %s193 = sand.u32 %s29, 1
        %s194 = scalar_lea.sflag [#allocation3], %s193
        %s195 = sand.u32 %s29, 1
        %s196 = smul.addr %s195, 8
        %s197 = scalar_lea.vmem [#allocation2], %s196
        %p198 = pneg %p42
        %p199 = pneg %p39
        %p200 = pneg %p63
        %p201 = pneg %p60
        %p202 = pneg %p84
        %p203 = pneg %p81
        %p204 = pneg %p110
        %p205 = pneg %p107
        %s206 = sand.u32 %s97, 1
        %s207 = scalar_lea.sflag [#allocation4], %s206
        %s208 = sand.u32 %s97, 1
        %s209 = smul.addr %s208, 8
        %s210 = scalar_lea.vmem [#allocation8], %s209
        %v211 = vld [vmem:[%s180] sm:$0xff]
        %212 = vadd.xlane.f32.xlu0 %v211
        %v213 = vpop.xlane.xlu0 %212
        %v214 = vmul.f32 %v213, 0.00390625
        %v215 = vld [vmem:[#allocation7] sm:$0xf]
        %v217 = vlaneseq
        %v218 = vand.u32 %v217, 127
        %v219 = vlaneseq
        %v220 = vshrl.u32 %v219, 7
        %v221 = vsub.s32 %v218, %v220
        %v222 = vrot.slane %v214, %v221
        %vm223 = vcmask 64512
        %v224 = vsel %vm223, %v222, 0
        %v227 = vsel %vm223, %v215, 0
        %229 = vmatprep.subr.mxu0 0.0
        %230 = vmatpush1.xpose.msra.mxu0 0.0
        %231 = vmatprep.subr.mxu0 0.0
        %232 = vmatpush1.xpose.msra.mxu0 0.0
        %233 = vmatprep.subr.mxu0 0.0
        %234 = vmatpush1.xpose.msra.mxu0 0.0
        %235 = vmatprep.subr.mxu0 0.0
        %236 = vmatpush1.xpose.msra.mxu0 0.0
        %237 = vmatprep.subr.mxu0 0.0
        %238 = vmatpush1.xpose.msra.mxu0 0.0
        %239 = vmatprep.subr.mxu0 0.0
        %240 = vmatpush1.xpose.msra.mxu0 0.0
        %241 = vmatprep.subr.mxu0 0.0
        %242 = vmatpush1.xpose.msra.mxu0 0.0
        %243 = vmatprep.subr.mxu0 0.0
        %244 = vmatpush1.xpose.msra.mxu0 0.0
        %245 = vmatprep.subr.mxu0 0.0
        %246 = vmatpush1.xpose.msra.mxu0 0.0
        %247 = vmatprep.subr.mxu0 0.0
        %248 = vmatpush1.xpose.msra.mxu0 0.0
        %249 = vmatprep.subr.mxu0 0.0
        %250 = vmatpush1.xpose.msra.mxu0 0.0
        %251 = vmatprep.subr.mxu0 0.0
        %252 = vmatpush1.xpose.msra.mxu0 0.0
        %253 = vmatprep.subr.mxu0 0.0
        %254 = vmatpush1.xpose.msra.mxu0 0.0
        %255 = vmatprep.subr.mxu0 0.0
        %256 = vmatpush1.xpose.msra.mxu0 0.0
        %257 = vmatprep.subr.mxu0 0.0
        %258 = vmatpush1.xpose.msra.mxu0 0.0
        %259 = vmatprep.subr.mxu0 0.0
        %260 = vmatpush1.xpose.msra.mxu0 %v227
        %261 = vmatprep.subr.mxu0 0.0
        %262 = vmatpush2.xpose.msra.mxu0 0.0
        %263 = vmatprep.subr.mxu0 0.0
        %264 = vmatpush2.xpose.msra.mxu0 0.0
        %265 = vmatprep.subr.mxu0 0.0
        %266 = vmatpush2.xpose.msra.mxu0 0.0
        %267 = vmatprep.subr.mxu0 0.0
        %268 = vmatpush2.xpose.msra.mxu0 0.0
        %269 = vmatprep.subr.mxu0 0.0
        %270 = vmatpush2.xpose.msra.mxu0 0.0
        %271 = vmatprep.subr.mxu0 0.0
        %272 = vmatpush2.xpose.msra.mxu0 0.0
        %273 = vmatprep.subr.mxu0 0.0
        %274 = vmatpush2.xpose.msra.mxu0 0.0
        %275 = vmatprep.subr.mxu0 0.0
        %276 = vmatpush2.xpose.msra.mxu0 0.0
        %277 = vmatprep.subr.mxu0 0.0
        %278 = vmatpush2.xpose.msra.mxu0 0.0
        %279 = vmatprep.subr.mxu0 0.0
        %280 = vmatpush2.xpose.msra.mxu0 0.0
        %281 = vmatprep.subr.mxu0 0.0
        %282 = vmatpush2.xpose.msra.mxu0 0.0
        %283 = vmatprep.subr.mxu0 0.0
        %284 = vmatpush2.xpose.msra.mxu0 0.0
        %285 = vmatprep.subr.mxu0 0.0
        %286 = vmatpush2.xpose.msra.mxu0 0.0
        %287 = vmatprep.subr.mxu0 0.0
        %288 = vmatpush2.xpose.msra.mxu0 0.0
        %289 = vmatprep.subr.mxu0 0.0
        %290 = vmatpush2.xpose.msra.mxu0 0.0
        %291 = vmatprep.subr.mxu0 0.0
        %292 = vmatpush2.xpose.msra.mxu0 0.0
        %293 = vmatprep.mubr.f32.mxu0 0.0
        %294 = vmatmul.mubr.f32.gmra.mxu0 %v224
        %v295 = vpop.f32.mrf.mxu0
        %v296 = vadd.f32 0.0, %v295
        %v297 = vpop.f32.mrf.mxu0
        %298 = vdwg.mxu0
        %v299 = vld [vmem:[#allocation5] sm:$0xf]
        %v300 = vlaneseq
        %v301 = vshrl.u32 %v300, 7
        %v302 = vsub.s32 0, %v301
        %v303 = vrot.slane %v296, %v302
        %305 = vbcast.lane.b32.xlu0 %v303, 256
        %v306 = vpop.permute.xlu0 %305
        %v307 = vmul.f32 %v306, %v299
        %vm308 = vcmask 27648
        %v309 = vsel %vm308, %v307, 0.0
        %v310 = vrot.slane %v309, 4
        %v311 = vadd.f32 %v309, %v310
        %v312 = vrot.slane %v311, 2
        %v313 = vadd.f32 %v311, %v312
        %v314 = vrot.slane %v313, 1
        %v315 = vadd.f32 %v313, %v314
        %v316 = vxor.u32 %v315, 2147483648
        %v317 = vmul.f32 %v316, 1.442695
        %v318 = vpow.pop %v317
        %v319 = vadd.f32 %v318, 1.0
        %v320 = vrcp.pop %v319
        %v321 = vmul.f32 1.0, %v320
        %vm322 = vcmask 31744
        %v324 = vsel %vm322, %v321, 0
        %vm326 = vcmask 1043456
        %v327 = vsel %vm326, %v215, 0
        %329 = vmatprep.subr.mxu0 0.0
        %330 = vmatpush1.msra.mxu0 0.0
        %331 = vmatprep.subr.mxu0 0.0
        %332 = vmatpush1.msra.mxu0 0.0
        %333 = vmatprep.subr.mxu0 0.0
        %334 = vmatpush1.msra.mxu0 0.0
        %335 = vmatprep.subr.mxu0 0.0
        %336 = vmatpush1.msra.mxu0 0.0
        %337 = vmatprep.subr.mxu0 0.0
        %338 = vmatpush1.msra.mxu0 0.0
        %339 = vmatprep.subr.mxu0 0.0
        %340 = vmatpush1.msra.mxu0 0.0
        %341 = vmatprep.subr.mxu0 0.0
        %342 = vmatpush1.msra.mxu0 0.0
        %343 = vmatprep.subr.mxu0 0.0
        %344 = vmatpush1.msra.mxu0 0.0
        %345 = vmatprep.subr.mxu0 0.0
        %346 = vmatpush1.msra.mxu0 0.0
        %347 = vmatprep.subr.mxu0 0.0
        %348 = vmatpush1.msra.mxu0 0.0
        %349 = vmatprep.subr.mxu0 0.0
        %350 = vmatpush1.msra.mxu0 0.0
        %351 = vmatprep.subr.mxu0 0.0
        %352 = vmatpush1.msra.mxu0 0.0
        %353 = vmatprep.subr.mxu0 0.0
        %354 = vmatpush1.msra.mxu0 0.0
        %355 = vmatprep.subr.mxu0 0.0
        %356 = vmatpush1.msra.mxu0 0.0
        %357 = vmatprep.subr.mxu0 0.0
        %358 = vmatpush1.msra.mxu0 0.0
        %359 = vmatprep.subr.mxu0 0.0
        %360 = vmatpush1.msra.mxu0 %v327
        %361 = vmatprep.subr.mxu0 0.0
        %362 = vmatpush2.msra.mxu0 0.0
        %363 = vmatprep.subr.mxu0 0.0
        %364 = vmatpush2.msra.mxu0 0.0
        %365 = vmatprep.subr.mxu0 0.0
        %366 = vmatpush2.msra.mxu0 0.0
        %367 = vmatprep.subr.mxu0 0.0
        %368 = vmatpush2.msra.mxu0 0.0
        %369 = vmatprep.subr.mxu0 0.0
        %370 = vmatpush2.msra.mxu0 0.0
        %371 = vmatprep.subr.mxu0 0.0
        %372 = vmatpush2.msra.mxu0 0.0
        %373 = vmatprep.subr.mxu0 0.0
        %374 = vmatpush2.msra.mxu0 0.0
        %375 = vmatprep.subr.mxu0 0.0
        %376 = vmatpush2.msra.mxu0 0.0
        %377 = vmatprep.subr.mxu0 0.0
        %378 = vmatpush2.msra.mxu0 0.0
        %379 = vmatprep.subr.mxu0 0.0
        %380 = vmatpush2.msra.mxu0 0.0
        %381 = vmatprep.subr.mxu0 0.0
        %382 = vmatpush2.msra.mxu0 0.0
        %383 = vmatprep.subr.mxu0 0.0
        %384 = vmatpush2.msra.mxu0 0.0
        %385 = vmatprep.subr.mxu0 0.0
        %386 = vmatpush2.msra.mxu0 0.0
        %387 = vmatprep.subr.mxu0 0.0
        %388 = vmatpush2.msra.mxu0 0.0
        %389 = vmatprep.subr.mxu0 0.0
        %390 = vmatpush2.msra.mxu0 0.0
        %391 = vmatprep.subr.mxu0 0.0
        %392 = vmatpush2.msra.mxu0 0.0
        %393 = vmatprep.mubr.f32.mxu0 0.0
        %394 = vmatmul.mubr.f32.gmra.mxu0 %v324
        %v395 = vpop.f32.mrf.mxu0
        %v396 = vadd.f32 0.0, %v395
        %v397 = vpop.f32.mrf.mxu0
        %398 = vdwg.mxu0
        %v399 = vlaneseq
        %v400 = vshrl.u32 %v399, 7
        %v401 = vsub.s32 0, %v400
        %v402 = vrot.slane %v396, %v401
        %404 = vbcast.lane.b32.xlu0 %v402, 256
        %v405 = vpop.permute.xlu0 %404
        %v406 = vmul.f32 %v211, %v405
        %407 = vst [vmem:[%s210] sm:$0xff] %v406
        %s408 = sand.u32 %s97, 1
        %s409 = scalar_lea.sflag [#allocation4], %s408
        %s410 = sand.u32 %s97, 1
        %s411 = smul.addr %s410, 8
        %s412 = scalar_lea.vmem [#allocation8], %s411
        // Predicated region
        $region45: #{tpu_custom_call.1} parent=31 // pred_check
          %p413 = pneg %p107
        $region46: #{tpu_custom_call.1} parent=31 // pred_check_branch
          %415 = sbr.rel (%p413) target = $region48
        $region47: #{tpu_custom_call.1} parent=31 // pred_region
          %s417 = ssub.s32 128, 128
          %418 = vsyncadd %s409, %s417
          %s419 = smul.addr %s21, 128
          %s420 = scalar_lea.hbm %s3, %s419
          %s422 = sshll.u32 %s412, 4
          %s423 = int_to_ptr.vmem [resolvable:$true] %s422
          %425 = dma.vmem_to_hbm [thread:$0]  %s423, 128, %s420, %s409
        $region48: #{tpu_custom_call.1} parent=31 // pred_fallthru
          _
      $region32: #{tpu_custom_call.1} parent=5 // pred_fallthru
        _
      %p426 = scmp.le.s32.totalorder 2, %s16
      // Predicated region
      $region49: #{tpu_custom_call.1} parent=5 // pred_check
        %p427 = pneg %p426
      $region50: #{tpu_custom_call.1} parent=5 // pred_check_branch
        %429 = sbr.rel (%p427) target = $region52
      $region51: #{tpu_custom_call.1} parent=5 // pred_region
        %s430 = ssub.s32 %s16, 2
        // Predicated region
        $region53: #{tpu_custom_call.1} parent=51 // pred_check
          %p431 = pneg %p113
        $region54: #{tpu_custom_call.1} parent=51 // pred_check_branch
          %433 = sbr.rel (%p431) target = $region56
        $region55: #{tpu_custom_call.1} parent=51 // pred_region
          %s434 = sand.u32 %s98, 1
          %s435 = scalar_lea.sflag [#allocation4], %s434
          %s436 = sand.u32 %s98, 1
          %s437 = smul.addr %s436, 8
          %s438 = scalar_lea.vmem [#allocation8], %s437
          %439 = dma.done %s435, 128
        $region56: #{tpu_custom_call.1} parent=51 // pred_fallthru
          _
      $region52: #{tpu_custom_call.1} parent=5 // pred_fallthru
        _
    $region6: #{tpu_custom_call.1} parent=1 // loop_footer
      %s20 = sadd.s32 1, %s16
    $region7: #{tpu_custom_call.1} parent=1 // loop_footer_branch
      %15 = sbr.rel target = $region3
    $region8: #{tpu_custom_call.1} parent=1 // loop_exit
      _
    %440 = vsyncpa [#allocation3], 1
    %s441 = scalar_lea.sflag [#allocation3], 1
    %442 = vsyncpa %s441, 1
    %443 = vsyncpa [#allocation6], 1
    %444 = vsyncpa [#allocation4], 1
    %s445 = scalar_lea.sflag [#allocation4], 1
    %446 = vsyncpa %s445, 1

</llo_original>
